<compile_context>
chip_gen: v5e
topology: v5e:2x2
jax: 0.10.0
libtpu: 0.0.40
codegen_flags: <defaults>
</compile_context>

<pallas_src>
import jax
import jax.numpy as jnp
from jax.experimental import pallas as pl
from jax.experimental.pallas import tpu as pltpu


def _sp_gcn_head_kernel(x_ref, w_ref, b_ref, adj_ref, o_ref, aw_ref, ab_ref):
    # x_ref:   (in_sz, TN)      streamed node tile
    # w_ref:   (out_sz, in_sz)  conv1d(k=1) weight (batch-shared)
    # b_ref:   (1, out_sz)      conv1d bias (lane-dense layout)
    # adj_ref: (M, out_sz)      scheme / adjacency for the current batch
    # o_ref:   (M, TN)          output tile
    # aw_ref:  (M, in_sz)       scratch: scheme[b] @ W
    # ab_ref:  (M, 1)  f32      scratch: scheme[b] @ bias
    @pl.when(pl.program_id(1) == 0)
    def _():
        adj = adj_ref[...]
        aw_ref[...] = jnp.dot(
            adj, w_ref[...], preferred_element_type=jnp.float32
        ).astype(aw_ref.dtype)
        ab_ref[...] = jnp.sum(
            adj.astype(jnp.float32) * b_ref[...].astype(jnp.float32),
            axis=-1, keepdims=True)

    out = jnp.dot(aw_ref[...], x_ref[...],
                  preferred_element_type=jnp.float32) + ab_ref[...]
    o_ref[...] = jnp.maximum(out, 0.0).astype(o_ref.dtype)


def _pick_tile_n(N, in_sz, M, itemsize, budget_bytes=20 * 1024 * 1024):
    """Largest lane-aligned (multiple-of-128) N tile that divides N and keeps
    the double-buffered x/out tiles within a conservative VMEM budget — safe
    against v7x's 64 MiB VMEM / 32 MiB scoped limit as well as v5e/v6e."""
    if N % 128 != 0:
        return N  # full-extent block is always legal
    for cand in (2048, 1024, 512, 256, 128):
        if N % cand == 0 and 2 * (in_sz + M) * cand * itemsize <= budget_bytes:
            return cand
    return 128


def sp_gcn_head_forward(x, weight, bias, scheme, compute_dtype=None):
    """x: (B, in_sz, N), weight: (out_sz, in_sz), bias: (out_sz,),
    scheme: (B, M, out_sz).  Returns relu(bmm(scheme, W @ x + b)): (B, M, N).

    compute_dtype: optional (e.g. jnp.bfloat16 on v6e/v7x) — inputs are cast,
    matmul accumulation stays f32, output keeps the original x dtype."""
    B, in_sz, N = x.shape
    out_sz = weight.shape[0]
    M = scheme.shape[1]
    out_dtype = x.dtype

    if compute_dtype is not None:
        x = x.astype(compute_dtype)
        weight = weight.astype(compute_dtype)
        scheme = scheme.astype(compute_dtype)
    bias2d = bias.reshape(1, out_sz).astype(x.dtype)

    tn = _pick_tile_n(N, in_sz, M, jnp.dtype(x.dtype).itemsize)
    grid = (B, pl.cdiv(N, tn))

    return pl.pallas_call(
        _sp_gcn_head_kernel,
        out_shape=jax.ShapeDtypeStruct((B, M, N), out_dtype),
        grid_spec=pltpu.PrefetchScalarGridSpec(
            num_scalar_prefetch=0,
            grid=grid,
            in_specs=[
                pl.BlockSpec((pl.Squeezed(), in_sz, tn), lambda b, n: (b, 0, n)),
                pl.BlockSpec((out_sz, in_sz), lambda b, n: (0, 0)),
                pl.BlockSpec((1, out_sz), lambda b, n: (0, 0)),
                pl.BlockSpec((pl.Squeezed(), M, out_sz), lambda b, n: (b, 0, 0)),
            ],
            out_specs=pl.BlockSpec((pl.Squeezed(), M, tn), lambda b, n: (b, 0, n)),
            scratch_shapes=[
                pltpu.VMEM((M, in_sz), x.dtype),   # scheme[b] @ W
                pltpu.VMEM((M, 1), jnp.float32),   # scheme[b] @ bias
            ],
        ),
        compiler_params=pltpu.CompilerParams(
            # Batch axis may be split across TensorCores (v7x megacore); the N
            # axis carries the per-batch hoisted scratch, so keep it serial.
            dimension_semantics=("parallel", "arbitrary"),
            vmem_limit_bytes=32 * 1024 * 1024,
        ),
    )(x, weight, bias2d, scheme)


def reference_forward(x, weight, bias, scheme):
    h = jnp.einsum("oc,bcn->bon", weight, x) + bias[None, :, None]
    out = jnp.einsum("bmo,bon->bmn", scheme, h)
    return jnp.maximum(out, 0.0)


if __name__ == "__main__":
    # Small deterministic shapes consistent with the module's forward:
    #   x: (B, in_sz, N nodes) -> conv1d(k=1) -> (B, out_sz, N),
    #   scheme: (B, M, out_sz) -> bmm -> (B, M, N), then ReLU.
    # N = 256 exercises the lane-dense N tiling (two 128-wide tiles) and the
    # pl.when-hoisted per-batch scratch path.
    B, in_sz, out_sz, N = 2, 8, 16, 256
    M = 16

    key = jax.random.PRNGKey(0)
    kx, kw, kb, ka = jax.random.split(key, 4)

    x = jax.random.normal(kx, (B, in_sz, N), dtype=jnp.float32)
    weight = jax.random.normal(kw, (out_sz, in_sz), dtype=jnp.float32) * 0.1
    bias = jax.random.normal(kb, (out_sz,), dtype=jnp.float32) * 0.1
    scheme = jax.random.uniform(ka, (B, M, out_sz), dtype=jnp.float32)

    out = sp_gcn_head_forward(x, weight, bias, scheme)
    out = jax.block_until_ready(out)

    ref = reference_forward(x, weight, bias, scheme)
    assert out.shape == (B, M, N)
    assert jnp.allclose(out, ref, atol=1e-4, rtol=1e-4), "mismatch vs reference"

    print("KERNEL_OK")
</pallas_src>

<mosaic_0001>
module attributes {stable_mosaic.version = 11 : i64} {
  func.func @_sp_gcn_head_kernel(%arg0: i32, %arg1: i32, %arg2: memref<1x8x256xf32, #tpu.memory_space<vmem>>, %arg3: memref<16x8xf32, #tpu.memory_space<vmem>>, %arg4: memref<1x16xf32, #tpu.memory_space<vmem>>, %arg5: memref<1x16x16xf32, #tpu.memory_space<vmem>>, %arg6: memref<1x16x256xf32, #tpu.memory_space<vmem>>, %arg7: memref<16x8xf32, #tpu.memory_space<vmem>>, %arg8: memref<16x1xf32, #tpu.memory_space<vmem>>) attributes {dimension_semantics = [#tpu.dimension_semantics<parallel>, #tpu.dimension_semantics<arbitrary>], iteration_bounds = array<i64: 2, 1>, scalar_prefetch = 0 : i64, scratch_operands = 2 : i64, tpu.core_type = #tpu.core_type<tc>, window_params = [{transform_indices = @transform_0, window_bounds = array<i64: 1, 8, 256>}, {pipeline_mode = #tpu.pipeline_mode<synchronous>, transform_indices = @transform_1, window_bounds = array<i64: 16, 8>}, {pipeline_mode = #tpu.pipeline_mode<synchronous>, transform_indices = @transform_2, window_bounds = array<i64: 1, 16>}, {transform_indices = @transform_3, window_bounds = array<i64: 1, 16, 16>}, {transform_indices = @transform_4, window_bounds = array<i64: 1, 16, 256>}]} {
    %c0_i32 = arith.constant 0 : i32
    %0 = arith.cmpi eq, %arg1, %c0_i32 : i32
    %1 = arith.extui %0 : i1 to i32
    %c0_i32_0 = arith.constant 0 : i32
    %2 = arith.cmpi ne, %1, %c0_i32_0 : i32
    scf.if %2 {
      %c0_11 = arith.constant 0 : index
      %c0_12 = arith.constant 0 : index
      %c0_13 = arith.constant 0 : index
      %15 = vector.load %arg5[%c0_11, %c0_12, %c0_13] : memref<1x16x16xf32, #tpu.memory_space<vmem>>, vector<1x16x16xf32>
      %16 = vector.shape_cast %15 : vector<1x16x16xf32> to vector<16x16xf32>
      %c0_14 = arith.constant 0 : index
      %c0_15 = arith.constant 0 : index
      %17 = vector.load %arg3[%c0_14, %c0_15] : memref<16x8xf32, #tpu.memory_space<vmem>>, vector<16x8xf32>
      %cst_16 = arith.constant dense<0.000000e+00> : vector<16x8xf32>
      %18 = tpu.matmul %16, %17, %cst_16 {dimension_numbers = #tpu.dot_dimension_numbers<[1], [0], [0], [1], [0, 0, 1, 1], [], []>} : vector<16x16xf32>, vector<16x8xf32>, vector<16x8xf32> -> vector<16x8xf32>
      %c0_17 = arith.constant 0 : index
      %c0_18 = arith.constant 0 : index
      %19 = vector.load %arg7[%c0_17, %c0_18] : memref<16x8xf32, #tpu.memory_space<vmem>>, vector<16x8xf32>
      tpu.vector_store %arg7[%c0_17, %c0_18], %18 {strides = array<i32>} : memref<16x8xf32, #tpu.memory_space<vmem>>, vector<16x8xf32>,
      %c0_19 = arith.constant 0 : index
      %c0_20 = arith.constant 0 : index
      %20 = vector.load %arg4[%c0_19, %c0_20] : memref<1x16xf32, #tpu.memory_space<vmem>>, vector<1x16xf32>
      %21 = vector.broadcast %20 : vector<1x16xf32> to vector<16x16xf32>
      %22 = arith.mulf %16, %21 : vector<16x16xf32>
      %cst_21 = arith.constant dense<0.000000e+00> : vector<16xf32>
      %23 = vector.multi_reduction <add>, %22, %cst_21 [1] : vector<16x16xf32> to vector<16xf32>
      %24 = vector.shape_cast %23 : vector<16xf32> to vector<16x1xf32>
      %c0_22 = arith.constant 0 : index
      %c0_23 = arith.constant 0 : index
      %25 = vector.load %arg8[%c0_22, %c0_23] : memref<16x1xf32, #tpu.memory_space<vmem>>, vector<16x1xf32>
      tpu.vector_store %arg8[%c0_22, %c0_23], %24 {strides = array<i32>} : memref<16x1xf32, #tpu.memory_space<vmem>>, vector<16x1xf32>,
    } else {
    }
    %c0 = arith.constant 0 : index
    %c0_1 = arith.constant 0 : index
    %3 = vector.load %arg7[%c0, %c0_1] : memref<16x8xf32, #tpu.memory_space<vmem>>, vector<16x8xf32>
    %c0_2 = arith.constant 0 : index
    %c0_3 = arith.constant 0 : index
    %c0_4 = arith.constant 0 : index
    %4 = vector.load %arg2[%c0_2, %c0_3, %c0_4] : memref<1x8x256xf32, #tpu.memory_space<vmem>>, vector<1x8x256xf32>
    %5 = vector.shape_cast %4 : vector<1x8x256xf32> to vector<8x256xf32>
    %cst = arith.constant dense<0.000000e+00> : vector<16x256xf32>
    %6 = tpu.matmul %3, %5, %cst {dimension_numbers = #tpu.dot_dimension_numbers<[1], [0], [0], [1], [0, 0, 1, 1], [], []>} : vector<16x8xf32>, vector<8x256xf32>, vector<16x256xf32> -> vector<16x256xf32>
    %c0_5 = arith.constant 0 : index
    %c0_6 = arith.constant 0 : index
    %7 = vector.load %arg8[%c0_5, %c0_6] : memref<16x1xf32, #tpu.memory_space<vmem>>, vector<16x1xf32>
    %8 = vector.broadcast %7 : vector<16x1xf32> to vector<16x256xf32>
    %9 = arith.addf %6, %8 : vector<16x256xf32>
    %cst_7 = arith.constant 0.000000e+00 : f32
    %10 = vector.broadcast %cst_7 : f32 to vector<16x256xf32>
    %11 = arith.maximumf %9, %10 : vector<16x256xf32>
    %c0_8 = arith.constant 0 : index
    %c0_9 = arith.constant 0 : index
    %c0_10 = arith.constant 0 : index
    %12 = vector.load %arg6[%c0_8, %c0_9, %c0_10] : memref<1x16x256xf32, #tpu.memory_space<vmem>>, vector<1x16x256xf32>
    %13 = vector.shape_cast %12 : vector<1x16x256xf32> to vector<16x256xf32>
    %14 = vector.shape_cast %11 : vector<16x256xf32> to vector<1x16x256xf32>
    tpu.vector_store %arg6[%c0_8, %c0_9, %c0_10], %14 {strides = array<i32>} : memref<1x16x256xf32, #tpu.memory_space<vmem>>, vector<1x16x256xf32>,
    return
  }
  func.func @transform_0(%arg0: i32, %arg1: i32) -> (i32, i32, i32) {
    %c0_i32 = arith.constant 0 : i32
    %c0_i32_0 = arith.constant 0 : i32
    return %arg0, %c0_i32, %arg1 : i32, i32, i32
  }
  func.func @transform_1(%arg0: i32, %arg1: i32) -> (i32, i32) {
    %c0_i32 = arith.constant 0 : i32
    %c0_i32_0 = arith.constant 0 : i32
    %c0_i32_1 = arith.constant 0 : i32
    return %c0_i32, %c0_i32_0 : i32, i32
  }
  func.func @transform_2(%arg0: i32, %arg1: i32) -> (i32, i32) {
    %c0_i32 = arith.constant 0 : i32
    %c0_i32_0 = arith.constant 0 : i32
    %c0_i32_1 = arith.constant 0 : i32
    return %c0_i32, %c0_i32_0 : i32, i32
  }
  func.func @transform_3(%arg0: i32, %arg1: i32) -> (i32, i32, i32) {
    %c0_i32 = arith.constant 0 : i32
    %c0_i32_0 = arith.constant 0 : i32
    %c0_i32_1 = arith.constant 0 : i32
    return %arg0, %c0_i32, %c0_i32_0 : i32, i32, i32
  }
  func.func @transform_4(%arg0: i32, %arg1: i32) -> (i32, i32, i32) {
    %c0_i32 = arith.constant 0 : i32
    %c0_i32_0 = arith.constant 0 : i32
    return %arg0, %c0_i32, %arg1 : i32, i32, i32
  }
}

</mosaic_0001>

<llo_original>
// kernel: tpu_custom_call.1
$region0: #{tpu_custom_call.1}
  #allocation0 [shape = 'u32[]', space=smem, size = 0x4, offset = 0x4, fixed_abs, tag = 'smem constant byte address 0x4 - core index']
  #allocation1 [shape = 'u32[72,128]{1,0:T(1,128)}', space=vmem, size = 0x9000, scoped, tag = 'internal scratch']
  #allocation2 [shape = 'f32[16,8]{1,0:T(8,128)}', space=vmem, size = 0x2000, scoped, tag = 'scratch operand']
  #allocation3 [shape = 'f32[16,1]{1,0:T(8,128)}', space=vmem, size = 0x2000, scoped, tag = 'scratch operand']
  %s0 = inlined_call_operand.hbm [shape: f32[2,8,256], index: 0, kind: input, shape index: {}]
  %s1 = inlined_call_operand.vmem [shape: f32[16,8], index: 1, kind: input, shape index: {}]
  %s2 = inlined_call_operand.vmem [shape: f32[1,16], index: 2, kind: input, shape index: {}]
  %s3 = inlined_call_operand.hbm [shape: f32[2,16,16], index: 3, kind: input, shape index: {}]
  %s4 = inlined_call_operand.hbm [shape: f32[2,16,256], index: 4, kind: output, shape index: {}]
  %s5 = sld [smem:[#allocation0]]
  $region61: #{tpu_custom_call.1} parent=0
    _
  %s7 = ssub.s32 1, %s5
  %s8 = scalar_select 0, %s7, %s5
  $region1: #{tpu_custom_call.1} parent=0
    #allocation4 [shape = 'u8[16384]{0}', space=vmem, size = 0x4000, scoped, tag = 'input window, operand 0']
    #allocation5 [shape = 's32[2]{0}', space=sflag, size = 0x8, scoped, tag = 'scoped memory for tpu_custom_call.1']
    #allocation6 [shape = 's32[2]{0}', space=sflag, size = 0x8, scoped, tag = 'scoped memory for tpu_custom_call.1']
    #allocation7 [shape = 'u8[16384]{0}', space=vmem, size = 0x4000, scoped, tag = 'input window, operand 3']
    #allocation8 [shape = 's32[2]{0}', space=sflag, size = 0x8, scoped, tag = 'scoped memory for tpu_custom_call.1']
    #allocation9 [shape = 'u8[32768]{0}', space=vmem, size = 0x8000, scoped, tag = 'output window, operand 0']
    %9 = vsyncpa [#allocation5], 0
    %s10 = scalar_lea.sflag [#allocation5], 1
    %11 = vsyncpa %s10, 0
    %12 = vsyncpa [#allocation8], 0
    %s13 = scalar_lea.sflag [#allocation8], 1
    %14 = vsyncpa %s13, 0
    %15 = vsyncpa [#allocation6], 0
    %s16 = scalar_lea.sflag [#allocation6], 1
    %17 = vsyncpa %s16, 0
    loop: start=0, step=1, limit=4
    $region2: #{tpu_custom_call.1} parent=1 // loop_pre_header
      _
    $region3: #{tpu_custom_call.1} parent=1 // loop_header
      %s19 = sphi 0, %s23
      %p20 = scmp.ge.s32.totalorder %s19, 4
      %s26 = sphi 0, %s38
      %s27 = sphi 0, %s34
      %s28 = sphi 0, %s26
      %s29 = sphi 0, %s27
      %s30 = sphi 0, %s28
      %s31 = sphi 0, %s29
      %s43 = sphi 0, %s45
      %s46 = sphi 0, %s43
      %s47 = sphi 0, %s46
      %s63 = sphi 0, %s47
      %s67 = sphi 0, %s67
      %s69 = sphi 0, %s67
      %s70 = sphi 0, %s69
      %s84 = sphi 0, %s70
      %s88 = sphi 0, %s88
      %s90 = sphi 0, %s88
      %s91 = sphi 0, %s90
      %s105 = sphi 0, %s91
      %s111 = sphi 0, %s113
      %s114 = sphi 0, %s111
      %s115 = sphi 0, %s114
      %s131 = sphi 0, %s115
      %s139 = sphi 0, %s141
      %s142 = sphi 0, %s139
      %s143 = sphi 0, %s142
      %s159 = sphi 0, %s143
    $region4: #{tpu_custom_call.1} parent=1 // loop_header_branch
      %22 = sbr.rel (%p20) target = $region8
    $region5: #{tpu_custom_call.1} parent=1 // loop_body
      %s24 = ssub.s32 %s19, 1
      %s25 = ssub.s32 %s19, 2
      %s32 = sadd.s32 1, %s27
      %p33 = scmp.ge.s32.totalorder %s32, 1
      %s34 = scalar_select %p33, 0, %s32
      %s35 = sadd.s32 1, %s26
      %s36 = scalar_select %p33, %s35, %s26
      %p37 = scmp.ge.s32.totalorder %s36, 2
      %s38 = scalar_select %p37, 0, %s36
      %s39 = ssub.s32 %s26, %s38
      %s40 = ssub.s32 %s27, %s34
      %s41 = sor.u32 %s39, %s40
      %p42 = scmp.eq.s32.totalorder %s41, 0
      %s44 = sadd.s32 %s43, 1
      %s45 = scalar_select %p42, %s43, %s44
      %p48 = pneg %p42
      %p49 = scmp.eq.s32.totalorder %s19, 1
      %p50 = por %p48, %p49
      %p51 = scmp.ne.s32.totalorder %s43, %s46
      %p52 = scmp.eq.s32.totalorder %s19, 0
      %p53 = por %p51, %p52
      %p54 = scmp.ne.s32.totalorder %s43, %s46
      %p55 = scmp.eq.s32.totalorder %s24, 1
      %p56 = por %p54, %p55
      %p57 = scmp.ne.s32.totalorder %s46, %s47
      %p58 = scmp.eq.s32.totalorder %s24, 0
      %p59 = por %p57, %p58
      %p60 = scmp.ne.s32.totalorder %s46, %s47
      %p61 = scmp.eq.s32.totalorder %s25, 1
      %p62 = por %p60, %p61
      %p64 = scmp.ne.s32.totalorder %s47, %s63
      %p65 = scmp.eq.s32.totalorder %s25, 0
      %p66 = por %p64, %p65
      %s68 = sadd.s32 %s67, 1
      %p71 = scmp.eq.s32.totalorder %s19, 1
      %p72 = scmp.ne.s32.totalorder %s67, %s69
      %p73 = scmp.eq.s32.totalorder %s19, 0
      %p74 = por %p72, %p73
      %p75 = scmp.ne.s32.totalorder %s67, %s69
      %p76 = scmp.eq.s32.totalorder %s24, 1
      %p77 = por %p75, %p76
      %p78 = scmp.ne.s32.totalorder %s69, %s70
      %p79 = scmp.eq.s32.totalorder %s24, 0
      %p80 = por %p78, %p79
      %p81 = scmp.ne.s32.totalorder %s69, %s70
      %p82 = scmp.eq.s32.totalorder %s25, 1
      %p83 = por %p81, %p82
      %p85 = scmp.ne.s32.totalorder %s70, %s84
      %p86 = scmp.eq.s32.totalorder %s25, 0
      %p87 = por %p85, %p86
      %s89 = sadd.s32 %s88, 1
      %p92 = scmp.eq.s32.totalorder %s19, 1
      %p93 = scmp.ne.s32.totalorder %s88, %s90
      %p94 = scmp.eq.s32.totalorder %s19, 0
      %p95 = por %p93, %p94
      %p96 = scmp.ne.s32.totalorder %s88, %s90
      %p97 = scmp.eq.s32.totalorder %s24, 1
      %p98 = por %p96, %p97
      %p99 = scmp.ne.s32.totalorder %s90, %s91
      %p100 = scmp.eq.s32.totalorder %s24, 0
      %p101 = por %p99, %p100
      %p102 = scmp.ne.s32.totalorder %s90, %s91
      %p103 = scmp.eq.s32.totalorder %s25, 1
      %p104 = por %p102, %p103
      %p106 = scmp.ne.s32.totalorder %s91, %s105
      %p107 = scmp.eq.s32.totalorder %s25, 0
      %p108 = por %p106, %p107
      %s109 = ssub.s32 %s26, %s38
      %p110 = scmp.eq.s32.totalorder %s109, 0
      %s112 = sadd.s32 %s111, 1
      %s113 = scalar_select %p110, %s111, %s112
      %p116 = pneg %p110
      %p117 = scmp.eq.s32.totalorder %s19, 1
      %p118 = por %p116, %p117
      %p119 = scmp.ne.s32.totalorder %s111, %s114
      %p120 = scmp.eq.s32.totalorder %s19, 0
      %p121 = por %p119, %p120
      %p122 = scmp.ne.s32.totalorder %s111, %s114
      %p123 = scmp.eq.s32.totalorder %s24, 1
      %p124 = por %p122, %p123
      %p125 = scmp.ne.s32.totalorder %s114, %s115
      %p126 = scmp.eq.s32.totalorder %s24, 0
      %p127 = por %p125, %p126
      %p128 = scmp.ne.s32.totalorder %s114, %s115
      %p129 = scmp.eq.s32.totalorder %s25, 1
      %p130 = por %p128, %p129
      %p132 = scmp.ne.s32.totalorder %s115, %s131
      %p133 = scmp.eq.s32.totalorder %s25, 0
      %p134 = por %p132, %p133
      %s135 = ssub.s32 %s26, %s38
      %s136 = ssub.s32 %s27, %s34
      %s137 = sor.u32 %s135, %s136
      %p138 = scmp.eq.s32.totalorder %s137, 0
      %s140 = sadd.s32 %s139, 1
      %s141 = scalar_select %p138, %s139, %s140
      %p144 = pneg %p138
      %p145 = scmp.eq.s32.totalorder %s19, 1
      %p146 = por %p144, %p145
      %p147 = scmp.ne.s32.totalorder %s139, %s142
      %p148 = scmp.eq.s32.totalorder %s19, 0
      %p149 = por %p147, %p148
      %p150 = scmp.ne.s32.totalorder %s139, %s142
      %p151 = scmp.eq.s32.totalorder %s24, 1
      %p152 = por %p150, %p151
      %p153 = scmp.ne.s32.totalorder %s142, %s143
      %p154 = scmp.eq.s32.totalorder %s24, 0
      %p155 = por %p153, %p154
      %p156 = scmp.ne.s32.totalorder %s142, %s143
      %p157 = scmp.eq.s32.totalorder %s25, 1
      %p158 = por %p156, %p157
      %p160 = scmp.ne.s32.totalorder %s143, %s159
      %p161 = scmp.eq.s32.totalorder %s25, 0
      %p162 = por %p160, %p161
      %p163 = scmp.le.s32.totalorder 1, %s19
      %p164 = scmp.lt.s32.totalorder %s19, 3
      %p165 = pnand %p163, %p164
      %p166 = pneg %p165
      // Predicated region
      $region9: #{tpu_custom_call.1} parent=5 // pred_check
        _
      $region10: #{tpu_custom_call.1} parent=5 // pred_check_branch
        %168 = sbr.rel (%p165) target = $region12
      $region11: #{tpu_custom_call.1} parent=5 // pred_region
        %s169 = ssub.s32 %s19, 1
        // Predicated region
        $region13: #{tpu_custom_call.1} parent=11 // pred_check
          %p170 = pneg %p80
        $region14: #{tpu_custom_call.1} parent=11 // pred_check_branch
          %172 = sbr.rel (%p170) target = $region16
        $region15: #{tpu_custom_call.1} parent=11 // pred_region
          _
        $region16: #{tpu_custom_call.1} parent=11 // pred_fallthru
          _
        // Predicated region
        $region17: #{tpu_custom_call.1} parent=11 // pred_check
          %p173 = pneg %p101
        $region18: #{tpu_custom_call.1} parent=11 // pred_check_branch
          %175 = sbr.rel (%p173) target = $region20
        $region19: #{tpu_custom_call.1} parent=11 // pred_region
          _
        $region20: #{tpu_custom_call.1} parent=11 // pred_fallthru
          _
      $region12: #{tpu_custom_call.1} parent=5 // pred_fallthru
        _
      %p176 = scmp.lt.s32.totalorder %s19, 2
      // Predicated region
      $region21: #{tpu_custom_call.1} parent=5 // pred_check
        %p177 = pneg %p176
      $region22: #{tpu_custom_call.1} parent=5 // pred_check_branch
        %179 = sbr.rel (%p177) target = $region24
      $region23: #{tpu_custom_call.1} parent=5 // pred_region
        // Predicated region
        $region25: #{tpu_custom_call.1} parent=23 // pred_check
          %p180 = pneg %p53
        $region26: #{tpu_custom_call.1} parent=23 // pred_check_branch
          %182 = sbr.rel (%p180) target = $region28
        $region27: #{tpu_custom_call.1} parent=23 // pred_region
          %s183 = sand.u32 %s43, 1
          %s184 = scalar_lea.sflag [#allocation5], %s183
          %s185 = sand.u32 %s43, 1
          %s186 = smul.addr %s185, 16
          %s187 = scalar_lea.vmem [#allocation4], %s186
          %s188 = smul.u32 2, %s27
          %190 = vsyncadd %s184, 0
          %s191 = smul.addr %s26, 2
          %s192 = sadd.s32 %s188, %s191
          %s193 = smul.addr %s192, 8
          %s194 = scalar_lea.hbm %s0, %s193
          %s196 = sshll.u32 %s194, 4
          %s197 = int_to_ptr.hbm [resolvable:$true] %s196
          %s198 = sshll.u32 %s187, 4
          %s199 = int_to_ptr.vmem [resolvable:$true] %s198
          %201 = dma.hbm_to_vmem [thread:$0]  %s197, 256, %s199, %s184
        $region28: #{tpu_custom_call.1} parent=23 // pred_fallthru
          _
        // Predicated region
        $region29: #{tpu_custom_call.1} parent=23 // pred_check
          %p202 = pneg %p121
        $region30: #{tpu_custom_call.1} parent=23 // pred_check_branch
          %204 = sbr.rel (%p202) target = $region32
        $region31: #{tpu_custom_call.1} parent=23 // pred_region
          %s205 = sand.u32 %s111, 1
          %s206 = scalar_lea.sflag [#allocation8], %s205
          %s207 = sand.u32 %s111, 1
          %s208 = smul.addr %s207, 16
          %s209 = scalar_lea.vmem [#allocation7], %s208
          %211 = vsyncadd %s206, 0
          %s212 = smul.addr %s26, 2
          %s213 = smul.addr %s212, 8
          %s214 = scalar_lea.hbm %s3, %s213
          %s215 = sshll.u32 %s214, 4
          %s216 = int_to_ptr.hbm [resolvable:$true] %s215
          %s217 = sshll.u32 %s209, 4
          %s218 = int_to_ptr.vmem [resolvable:$true] %s217
          %223 = dma.hbm_to_vmem [thread:$0]  %s216, 256, %s218, %s206, 128, 128, 8
        $region32: #{tpu_custom_call.1} parent=23 // pred_fallthru
          _
      $region24: #{tpu_custom_call.1} parent=5 // pred_fallthru
        _
      %p224 = scmp.le.s32.totalorder 1, %s19
      %p225 = scmp.lt.s32.totalorder %s19, 3
      %p226 = pnand %p224, %p225
      %p227 = pneg %p226
      // Predicated region
      $region33: #{tpu_custom_call.1} parent=5 // pred_check
        _
      $region34: #{tpu_custom_call.1} parent=5 // pred_check_branch
        %229 = sbr.rel (%p226) target = $region36
      $region35: #{tpu_custom_call.1} parent=5 // pred_region
        %s230 = ssub.s32 %s19, 1
        %s231 = sand.u32 %s46, 1
        %s232 = scalar_lea.sflag [#allocation5], %s231
        %s233 = sand.u32 %s46, 1
        %s234 = smul.addr %s233, 16
        %s235 = scalar_lea.vmem [#allocation4], %s234
        // Predicated region
        $region37: #{tpu_custom_call.1} parent=35 // pred_check
          %p236 = pneg %p59
        $region38: #{tpu_custom_call.1} parent=35 // pred_check_branch
          %238 = sbr.rel (%p236) target = $region40
        $region39: #{tpu_custom_call.1} parent=35 // pred_region
          %240 = dma.done %s232, 256
        $region40: #{tpu_custom_call.1} parent=35 // pred_fallthru
          _
        %s241 = sand.u32 %s114, 1
        %s242 = scalar_lea.sflag [#allocation8], %s241
        %s243 = sand.u32 %s114, 1
        %s244 = smul.addr %s243, 16
        %s245 = scalar_lea.vmem [#allocation7], %s244
        // Predicated region
        $region41: #{tpu_custom_call.1} parent=35 // pred_check
          %p246 = pneg %p127
        $region42: #{tpu_custom_call.1} parent=35 // pred_check_branch
          %248 = sbr.rel (%p246) target = $region44
        $region43: #{tpu_custom_call.1} parent=35 // pred_region
          %250 = dma.done %s242, 256
        $region44: #{tpu_custom_call.1} parent=35 // pred_fallthru
          _
        %s251 = sand.u32 %s46, 1
        %s252 = scalar_lea.sflag [#allocation5], %s251
        %s253 = sand.u32 %s46, 1
        %s254 = smul.addr %s253, 16
        %s255 = scalar_lea.vmem [#allocation4], %s254
        %p256 = pneg %p59
        %p257 = pneg %p56
        %p258 = pneg %p80
        %p259 = pneg %p77
        %p260 = pneg %p101
        %p261 = pneg %p98
        %s262 = sand.u32 %s114, 1
        %s263 = scalar_lea.sflag [#allocation8], %s262
        %s264 = sand.u32 %s114, 1
        %s265 = smul.addr %s264, 16
        %s266 = scalar_lea.vmem [#allocation7], %s265
        %p267 = pneg %p127
        %p268 = pneg %p124
        %p269 = pneg %p155
        %p270 = pneg %p152
        %s271 = sand.u32 %s142, 1
        %s272 = scalar_lea.sflag [#allocation6], %s271
        %s273 = sand.u32 %s142, 1
        %s274 = smul.addr %s273, 32
        %s275 = scalar_lea.vmem [#allocation9], %s274
        %s276 = smul.u32 2, %s29
        %s277 = smul.u32 2, %s29
        %p278 = scmp.eq.s32.totalorder %s29, 0
        // Predicated region
        $region45: #{tpu_custom_call.1} parent=35 // pred_check
          %p279 = pneg %p278
        $region46: #{tpu_custom_call.1} parent=35 // pred_check_branch
          %281 = sbr.rel (%p279) target = $region48
        $region47: #{tpu_custom_call.1} parent=35 // pred_region
          %v282 = vld [vmem:[%s245] sm:$0xff]
          %v283 = vld [vmem:[%s245 + $0x8] sm:$0xff]
          %v284 = vld [vmem:[%s1] sm:$0xff]
          %v285 = vld [vmem:[%s1 + $0x8] sm:$0xff]
          %vm286 = vcmask 130048
          %v288 = vsel %vm286, %v282, 0
          %v291 = vsel %vm286, %v283, 0
          %293 = vmatpush.msra.mxu0 0.0
          %294 = vmatpush.msra.mxu0 0.0
          %295 = vmatpush.msra.mxu0 0.0
          %296 = vmatpush.msra.mxu0 0.0
          %297 = vmatpush.msra.mxu0 0.0
          %298 = vmatpush.msra.mxu0 0.0
          %299 = vmatpush.msra.mxu0 0.0
          %300 = vmatpush.msra.mxu0 0.0
          %301 = vmatpush.msra.mxu0 0.0
          %302 = vmatpush.msra.mxu0 0.0
          %303 = vmatpush.msra.mxu0 0.0
          %304 = vmatpush.msra.mxu0 0.0
          %305 = vmatpush.msra.mxu0 0.0
          %306 = vmatpush.msra.mxu0 0.0
          %307 = vmatpush.msra.mxu0 %v285
          %308 = vmatpush.msra.mxu0 %v284
          %309 = vmatmul.f32.gmra.mxu0 %v288
          %v310 = vpop.f32.mrf.mxu0
          %v311 = vadd.f32 0.0, %v310
          %312 = vmatmul.f32.gmra.mxu0 %v291
          %v313 = vpop.f32.mrf.mxu0
          %v314 = vadd.f32 0.0, %v313
          %315 = vdwg.mxu0
          %vm316 = vcmask 64512
          %317 = vst.msk [vmem:[#allocation2] sm:$0xff] %vm316, %v311
          %318 = vst.msk [vmem:[#allocation2 + $0x8] sm:$0xff] %vm316, %v314
          %v319 = vld [vmem:[%s2] sm:$0x1]
          %v321 = vperm.slane %v319, 0
          %v323 = vmul.f32 %v282, %v321
          %v324 = vmul.f32 %v283, %v321
          %v325 = vsel %vm286, %v323, 0.0
          %326 = vadd.xlane.f32.xlu0 %v325
          %v327 = vpop.xlane.xlu0 %326
          %v328 = vsel %vm286, %v324, 0.0
          %329 = vadd.xlane.f32.xlu0 %v328
          %v330 = vpop.xlane.xlu0 %329
          %vm331 = vcmask 7168
          %332 = vst.msk [vmem:[#allocation3] sm:$0xff] %vm331, %v327
          %333 = vst.msk [vmem:[#allocation3 + $0x8] sm:$0xff] %vm331, %v330
        $region48: #{tpu_custom_call.1} parent=35 // pred_fallthru
          _
        %v334 = vld [vmem:[#allocation2] sm:$0xff]
        %v335 = vld [vmem:[#allocation2 + $0x8] sm:$0xff]
        %v336 = vld [vmem:[%s235] sm:$0xff]
        %v337 = vld [vmem:[%s235 + $0x8] sm:$0xff]
        %v338 = vld [vmem:[#allocation3] sm:$0xff]
        %v339 = vld [vmem:[#allocation3 + $0x8] sm:$0xff]
        %341 = vset.pattern.permute.xlu0 0
        %342 = vperm.xlu0 %341, %v338
        %v343 = vpop.permute.xlu0 %342
        %346 = vset.pattern.permute.xlu0 0
        %347 = vperm.xlu0 %346, %v339
        %v348 = vpop.permute.xlu0 %347
        %vm350 = vcmask 64512
        %v352 = vsel %vm350, %v334, 0
        %v355 = vsel %vm350, %v335, 0
        %357 = vmatpush.msra.mxu0 0.0
        %358 = vmatpush.msra.mxu0 0.0
        %359 = vmatpush.msra.mxu0 0.0
        %360 = vmatpush.msra.mxu0 0.0
        %361 = vmatpush.msra.mxu0 0.0
        %362 = vmatpush.msra.mxu0 0.0
        %363 = vmatpush.msra.mxu0 0.0
        %364 = vmatpush.msra.mxu0 0.0
        %365 = vmatpush.msra.mxu0 0.0
        %366 = vmatpush.msra.mxu0 0.0
        %367 = vmatpush.msra.mxu0 0.0
        %368 = vmatpush.msra.mxu0 0.0
        %369 = vmatpush.msra.mxu0 0.0
        %370 = vmatpush.msra.mxu0 0.0
        %371 = vmatpush.msra.mxu0 0.0
        %372 = vmatpush.msra.mxu0 %v336
        %373 = vmatmul.f32.gmra.mxu0 %v352
        %v374 = vpop.f32.mrf.mxu0
        %v375 = vadd.f32 %v343, %v374
        %376 = vmatmul.f32.gmra.mxu0 %v355
        %v377 = vpop.f32.mrf.mxu0
        %v378 = vadd.f32 %v348, %v377
        %379 = vdwg.mxu0
        %380 = vmatpush.msra.mxu0 0.0
        %381 = vmatpush.msra.mxu0 0.0
        %382 = vmatpush.msra.mxu0 0.0
        %383 = vmatpush.msra.mxu0 0.0
        %384 = vmatpush.msra.mxu0 0.0
        %385 = vmatpush.msra.mxu0 0.0
        %386 = vmatpush.msra.mxu0 0.0
        %387 = vmatpush.msra.mxu0 0.0
        %388 = vmatpush.msra.mxu0 0.0
        %389 = vmatpush.msra.mxu0 0.0
        %390 = vmatpush.msra.mxu0 0.0
        %391 = vmatpush.msra.mxu0 0.0
        %392 = vmatpush.msra.mxu0 0.0
        %393 = vmatpush.msra.mxu0 0.0
        %394 = vmatpush.msra.mxu0 0.0
        %395 = vmatpush.msra.mxu0 %v337
        %396 = vmatmul.f32.gmra.mxu0 %v352
        %v397 = vpop.f32.mrf.mxu0
        %v398 = vadd.f32 %v343, %v397
        %399 = vmatmul.f32.gmra.mxu0 %v355
        %v400 = vpop.f32.mrf.mxu0
        %v401 = vadd.f32 %v348, %v400
        %402 = vdwg.mxu0
        %v403 = vmax.f32 %v375, 0.0
        %v404 = vmax.f32 %v398, 0.0
        %v405 = vmax.f32 %v378, 0.0
        %v406 = vmax.f32 %v401, 0.0
        %407 = vst [vmem:[%s275] sm:$0xff] %v403
        %408 = vst [vmem:[%s275 + $0x8] sm:$0xff] %v404
        %409 = vst [vmem:[%s275 + $0x10] sm:$0xff] %v405
        %410 = vst [vmem:[%s275 + $0x18] sm:$0xff] %v406
        %s411 = sand.u32 %s142, 1
        %s412 = scalar_lea.sflag [#allocation6], %s411
        %s413 = sand.u32 %s142, 1
        %s414 = smul.addr %s413, 32
        %s415 = scalar_lea.vmem [#allocation9], %s414
        // Predicated region
        $region49: #{tpu_custom_call.1} parent=35 // pred_check
          %p416 = pneg %p152
        $region50: #{tpu_custom_call.1} parent=35 // pred_check_branch
          %418 = sbr.rel (%p416) target = $region52
        $region51: #{tpu_custom_call.1} parent=35 // pred_region
          %s419 = smul.u32 2, %s29
          %421 = vsyncadd %s412, 0
          %s422 = smul.addr %s28, 4
          %s423 = sadd.s32 %s419, %s422
          %s424 = smul.addr %s423, 8
          %s425 = scalar_lea.hbm %s4, %s424
          %s426 = sshll.u32 %s415, 4
          %s427 = int_to_ptr.vmem [resolvable:$true] %s426
          %s428 = sshll.u32 %s425, 4
          %s429 = int_to_ptr.hbm [resolvable:$true] %s428
          %434 = dma.vmem_to_hbm [thread:$0]  %s427, 512, %s429, %s412, 256, 256, 16
        $region52: #{tpu_custom_call.1} parent=35 // pred_fallthru
          _
      $region36: #{tpu_custom_call.1} parent=5 // pred_fallthru
        _
      %p435 = scmp.le.s32.totalorder 2, %s19
      // Predicated region
      $region53: #{tpu_custom_call.1} parent=5 // pred_check
        %p436 = pneg %p435
      $region54: #{tpu_custom_call.1} parent=5 // pred_check_branch
        %438 = sbr.rel (%p436) target = $region56
      $region55: #{tpu_custom_call.1} parent=5 // pred_region
        %s439 = ssub.s32 %s19, 2
        // Predicated region
        $region57: #{tpu_custom_call.1} parent=55 // pred_check
          %p440 = pneg %p158
        $region58: #{tpu_custom_call.1} parent=55 // pred_check_branch
          %442 = sbr.rel (%p440) target = $region60
        $region59: #{tpu_custom_call.1} parent=55 // pred_region
          %s443 = sand.u32 %s143, 1
          %s444 = scalar_lea.sflag [#allocation6], %s443
          %s445 = sand.u32 %s143, 1
          %s446 = smul.addr %s445, 32
          %s447 = scalar_lea.vmem [#allocation9], %s446
          %449 = dma.done %s444, 512
        $region60: #{tpu_custom_call.1} parent=55 // pred_fallthru
          _
      $region56: #{tpu_custom_call.1} parent=5 // pred_fallthru
        _
    $region6: #{tpu_custom_call.1} parent=1 // loop_footer
      %s23 = sadd.s32 1, %s19
    $region7: #{tpu_custom_call.1} parent=1 // loop_footer_branch
      %18 = sbr.rel target = $region3
    $region8: #{tpu_custom_call.1} parent=1 // loop_exit
      _
    %450 = vsyncpa [#allocation5], 1
    %s451 = scalar_lea.sflag [#allocation5], 1
    %452 = vsyncpa %s451, 1
    %453 = vsyncpa [#allocation8], 1
    %s454 = scalar_lea.sflag [#allocation8], 1
    %455 = vsyncpa %s454, 1
    %456 = vsyncpa [#allocation6], 1
    %s457 = scalar_lea.sflag [#allocation6], 1
    %458 = vsyncpa %s457, 1

</llo_original>
